<compile_context>
chip_gen: v7x
topology: tpu7x:2x2x1
jax: 0.10.0
libtpu: 0.0.40
codegen_flags: <defaults>
</compile_context>

<pallas_src>
import jax
import jax.numpy as jnp
from jax.experimental import pallas as pl
from jax.experimental.pallas import tpu as pltpu


def _round_up(n, m):
    return ((n + m - 1) // m) * m


def mlp_kernel(x_ref, w1_ref, b1_ref, w2_ref, b2_ref, w3_ref, b3_ref, o_ref):
    # x streams as f32 (single HBM read); downcast to bf16 in VMEM for the MXU.
    x_bf = x_ref[...].astype(jnp.bfloat16)
    # fc1: bf16 operands, f32 accumulation on the MXU; bias + ReLU in f32.
    h1 = jnp.dot(x_bf, w1_ref[...], preferred_element_type=jnp.float32)
    h1 = jnp.maximum(h1 + b1_ref[...], 0.0)
    # fc2
    h2 = jnp.dot(h1.astype(jnp.bfloat16), w2_ref[...],
                 preferred_element_type=jnp.float32)
    h2 = jnp.maximum(h2 + b2_ref[...], 0.0)
    # fc3: output columns zero-padded to 128 -> lane-dense, unmasked store.
    out = jnp.dot(h2.astype(jnp.bfloat16), w3_ref[...],
                  preferred_element_type=jnp.float32)
    o_ref[...] = (out + b3_ref[...]).astype(o_ref.dtype)   # bf16 writeback


def _choose_tile(B, batch_tile):
    # Multiple of 16 (bf16 output sublane packing; also satisfies f32's 8).
    tile = min(batch_tile, _round_up(B, 16))
    # For big batches guarantee >= 2 grid steps so the "parallel" batch axis
    # can shard across v7x's two TensorCores.
    if B >= 256:
        tile = min(tile, _round_up(pl.cdiv(B, 2), 16))
    return max(16, _round_up(tile, 16))


def mlp_forward(x, w1, b1, w2, b2, w3, b3, *, batch_tile=1024):
    B, in_size = x.shape
    h1_size = w1.shape[1]
    h2_size = w2.shape[1]
    out_size = w3.shape[1]

    # Lane-dense padded output width (multiple of 128 lanes).
    out_pad = max(128, _round_up(out_size, 128))
    w3p = w3 if out_pad == out_size else jnp.pad(w3, ((0, 0), (0, out_pad - out_size)))
    b3p = b3 if out_pad == out_size else jnp.pad(b3, ((0, 0), (0, out_pad - out_size)))

    # Weights stream as bf16 (tiny, one-time cast); biases stay f32 (added to
    # the f32 accumulators).  x is passed through untouched (f32).
    w1_bf = w1.astype(jnp.bfloat16)
    w2_bf = w2.astype(jnp.bfloat16)
    w3_bf = w3p.astype(jnp.bfloat16)
    b1_f = b1.astype(jnp.float32)
    b2_f = b2.astype(jnp.float32)
    b3_f = b3p.astype(jnp.float32)

    tile = _choose_tile(B, batch_tile)
    grid = (pl.cdiv(B, tile),)

    out_padded = pl.pallas_call(
        mlp_kernel,
        out_shape=jax.ShapeDtypeStruct((B, out_pad), jnp.bfloat16),
        grid_spec=pltpu.PrefetchScalarGridSpec(
            num_scalar_prefetch=0,
            grid=grid,
            in_specs=[
                pl.BlockSpec((tile, in_size), lambda i: (i, 0)),      # x tile (f32)
                pl.BlockSpec((in_size, h1_size), lambda i: (0, 0)),   # W1 (bf16, resident)
                pl.BlockSpec((1, h1_size), lambda i: (0, 0)),         # b1 (f32)
                pl.BlockSpec((h1_size, h2_size), lambda i: (0, 0)),   # W2 (bf16, resident)
                pl.BlockSpec((1, h2_size), lambda i: (0, 0)),         # b2 (f32)
                pl.BlockSpec((h2_size, out_pad), lambda i: (0, 0)),   # W3 padded (bf16)
                pl.BlockSpec((1, out_pad), lambda i: (0, 0)),         # b3 padded (f32)
            ],
            out_specs=pl.BlockSpec((tile, out_pad), lambda i: (i, 0)),
        ),
        compiler_params=pltpu.CompilerParams(
            dimension_semantics=("parallel",),
            vmem_limit_bytes=32 * 1024 * 1024,
        ),
    )(x, w1_bf, b1_f, w2_bf, b2_f, w3_bf, b3_f)

    return out_padded[:, :out_size].astype(x.dtype)


def init_params(key, input_size=784, hidden_size1=128, hidden_size2=64,
                output_size=10, dtype=jnp.float32):
    """Kaiming-uniform-ish init matching nn.Linear; weights stored as [in, out]."""
    ks = jax.random.split(key, 6)

    def linear(kw, kb, fan_in, fan_out):
        bound = 1.0 / jnp.sqrt(fan_in)
        w = jax.random.uniform(kw, (fan_in, fan_out), dtype, -bound, bound)
        b = jax.random.uniform(kb, (1, fan_out), dtype, -bound, bound)
        return w, b

    w1, b1 = linear(ks[0], ks[1], input_size, hidden_size1)
    w2, b2 = linear(ks[2], ks[3], hidden_size1, hidden_size2)
    w3, b3 = linear(ks[4], ks[5], hidden_size2, output_size)
    return w1, b1, w2, b2, w3, b3


if __name__ == "__main__":
    key = jax.random.PRNGKey(0)
    k_params, k_x, k_x2 = jax.random.split(key, 3)

    input_size, h1, h2, out_size = 784, 128, 64, 10
    batch = 32

    w1, b1, w2, b2, w3, b3 = init_params(k_params, input_size, h1, h2, out_size)

    # Reference mirroring the kernel's bf16-stream / f32-accumulate numerics
    # (including the final bf16 writeback rounding).
    def ref_bf16(xx):
        a = jnp.dot(xx.astype(jnp.bfloat16), w1.astype(jnp.bfloat16),
                    preferred_element_type=jnp.float32) + b1
        a = jnp.maximum(a, 0.0)
        a = jnp.dot(a.astype(jnp.bfloat16), w2.astype(jnp.bfloat16),
                    preferred_element_type=jnp.float32) + b2
        a = jnp.maximum(a, 0.0)
        out = jnp.dot(a.astype(jnp.bfloat16), w3.astype(jnp.bfloat16),
                      preferred_element_type=jnp.float32) + b3
        return out.astype(jnp.bfloat16).astype(jnp.float32)

    # Full-f32 PyTorch-semantics reference (looser tol due to bf16 streaming).
    def ref_f32(xx):
        a = jnp.maximum(xx @ w1 + b1, 0.0)
        a = jnp.maximum(a @ w2 + b2, 0.0)
        return a @ w3 + b3

    # --- Small batch: single grid step. ---
    x = jax.random.normal(k_x, (batch, input_size), jnp.float32)
    y = jax.block_until_ready(mlp_forward(x, w1, b1, w2, b2, w3, b3))
    assert y.shape == (batch, out_size)
    assert jnp.allclose(y, ref_bf16(x), atol=2e-2, rtol=2e-2)
    assert jnp.allclose(y, ref_f32(x), atol=5e-2, rtol=5e-2)

    # --- Larger, non-tile-multiple batch: >=2 grid steps + masked last block. ---
    x2 = jax.random.normal(k_x2, (300, input_size), jnp.float32)
    y2 = jax.block_until_ready(mlp_forward(x2, w1, b1, w2, b2, w3, b3))
    assert y2.shape == (300, out_size)
    assert jnp.allclose(y2, ref_bf16(x2), atol=2e-2, rtol=2e-2)
    assert jnp.allclose(y2, ref_f32(x2), atol=5e-2, rtol=5e-2)

    print("KERNEL_OK")
</pallas_src>

<mosaic_0001>
module attributes {stable_mosaic.version = 11 : i64} {
  func.func @mlp_kernel(%arg0: i32, %arg1: memref<32x784xf32, #tpu.memory_space<vmem>>, %arg2: memref<784x128xbf16, #tpu.memory_space<vmem>>, %arg3: memref<1x128xf32, #tpu.memory_space<vmem>>, %arg4: memref<128x64xbf16, #tpu.memory_space<vmem>>, %arg5: memref<1x64xf32, #tpu.memory_space<vmem>>, %arg6: memref<64x128xbf16, #tpu.memory_space<vmem>>, %arg7: memref<1x128xf32, #tpu.memory_space<vmem>>, %arg8: memref<32x128xbf16, #tpu.memory_space<vmem>>) attributes {dimension_semantics = [#tpu.dimension_semantics<parallel>], iteration_bounds = array<i64: 1>, scalar_prefetch = 0 : i64, scratch_operands = 0 : i64, tpu.core_type = #tpu.core_type<tc>, window_params = [{transform_indices = @transform_0, window_bounds = array<i64: 32, 784>}, {pipeline_mode = #tpu.pipeline_mode<synchronous>, transform_indices = @transform_1, window_bounds = array<i64: 784, 128>}, {pipeline_mode = #tpu.pipeline_mode<synchronous>, transform_indices = @transform_2, window_bounds = array<i64: 1, 128>}, {pipeline_mode = #tpu.pipeline_mode<synchronous>, transform_indices = @transform_3, window_bounds = array<i64: 128, 64>}, {pipeline_mode = #tpu.pipeline_mode<synchronous>, transform_indices = @transform_4, window_bounds = array<i64: 1, 64>}, {pipeline_mode = #tpu.pipeline_mode<synchronous>, transform_indices = @transform_5, window_bounds = array<i64: 64, 128>}, {pipeline_mode = #tpu.pipeline_mode<synchronous>, transform_indices = @transform_6, window_bounds = array<i64: 1, 128>}, {transform_indices = @transform_7, window_bounds = array<i64: 32, 128>}]} {
    %c0 = arith.constant 0 : index
    %c0_0 = arith.constant 0 : index
    %0 = vector.load %arg1[%c0, %c0_0] : memref<32x784xf32, #tpu.memory_space<vmem>>, vector<32x784xf32>
    %1 = arith.truncf %0 : vector<32x784xf32> to vector<32x784xbf16>
    %c0_1 = arith.constant 0 : index
    %c0_2 = arith.constant 0 : index
    %2 = vector.load %arg2[%c0_1, %c0_2] : memref<784x128xbf16, #tpu.memory_space<vmem>>, vector<784x128xbf16>
    %cst = arith.constant dense<0.000000e+00> : vector<32x128xf32>
    %3 = tpu.matmul %1, %2, %cst {dimension_numbers = #tpu.dot_dimension_numbers<[1], [0], [0], [1], [0, 0, 1, 1], [], []>} : vector<32x784xbf16>, vector<784x128xbf16>, vector<32x128xf32> -> vector<32x128xf32>
    %c0_3 = arith.constant 0 : index
    %c0_4 = arith.constant 0 : index
    %4 = vector.load %arg3[%c0_3, %c0_4] : memref<1x128xf32, #tpu.memory_space<vmem>>, vector<1x128xf32>
    %5 = vector.broadcast %4 : vector<1x128xf32> to vector<32x128xf32>
    %6 = arith.addf %3, %5 : vector<32x128xf32>
    %cst_5 = arith.constant 0.000000e+00 : f32
    %7 = vector.broadcast %cst_5 : f32 to vector<32x128xf32>
    %8 = arith.maximumf %6, %7 : vector<32x128xf32>
    %9 = arith.truncf %8 : vector<32x128xf32> to vector<32x128xbf16>
    %c0_6 = arith.constant 0 : index
    %c0_7 = arith.constant 0 : index
    %10 = vector.load %arg4[%c0_6, %c0_7] : memref<128x64xbf16, #tpu.memory_space<vmem>>, vector<128x64xbf16>
    %cst_8 = arith.constant dense<0.000000e+00> : vector<32x64xf32>
    %11 = tpu.matmul %9, %10, %cst_8 {dimension_numbers = #tpu.dot_dimension_numbers<[1], [0], [0], [1], [0, 0, 1, 1], [], []>} : vector<32x128xbf16>, vector<128x64xbf16>, vector<32x64xf32> -> vector<32x64xf32>
    %c0_9 = arith.constant 0 : index
    %c0_10 = arith.constant 0 : index
    %12 = vector.load %arg5[%c0_9, %c0_10] : memref<1x64xf32, #tpu.memory_space<vmem>>, vector<1x64xf32>
    %13 = vector.broadcast %12 : vector<1x64xf32> to vector<32x64xf32>
    %14 = arith.addf %11, %13 : vector<32x64xf32>
    %cst_11 = arith.constant 0.000000e+00 : f32
    %15 = vector.broadcast %cst_11 : f32 to vector<32x64xf32>
    %16 = arith.maximumf %14, %15 : vector<32x64xf32>
    %17 = arith.truncf %16 : vector<32x64xf32> to vector<32x64xbf16>
    %c0_12 = arith.constant 0 : index
    %c0_13 = arith.constant 0 : index
    %18 = vector.load %arg6[%c0_12, %c0_13] : memref<64x128xbf16, #tpu.memory_space<vmem>>, vector<64x128xbf16>
    %cst_14 = arith.constant dense<0.000000e+00> : vector<32x128xf32>
    %19 = tpu.matmul %17, %18, %cst_14 {dimension_numbers = #tpu.dot_dimension_numbers<[1], [0], [0], [1], [0, 0, 1, 1], [], []>} : vector<32x64xbf16>, vector<64x128xbf16>, vector<32x128xf32> -> vector<32x128xf32>
    %c0_15 = arith.constant 0 : index
    %c0_16 = arith.constant 0 : index
    %20 = vector.load %arg7[%c0_15, %c0_16] : memref<1x128xf32, #tpu.memory_space<vmem>>, vector<1x128xf32>
    %21 = vector.broadcast %20 : vector<1x128xf32> to vector<32x128xf32>
    %22 = arith.addf %19, %21 : vector<32x128xf32>
    %23 = arith.truncf %22 : vector<32x128xf32> to vector<32x128xbf16>
    %c0_17 = arith.constant 0 : index
    %c0_18 = arith.constant 0 : index
    %24 = vector.load %arg8[%c0_17, %c0_18] : memref<32x128xbf16, #tpu.memory_space<vmem>>, vector<32x128xbf16>
    tpu.vector_store %arg8[%c0_17, %c0_18], %23 {strides = array<i32>} : memref<32x128xbf16, #tpu.memory_space<vmem>>, vector<32x128xbf16>,
    return
  }
  func.func @transform_0(%arg0: i32) -> (i32, i32) {
    %c0_i32 = arith.constant 0 : i32
    %c0_i32_0 = arith.constant 0 : i32
    return %arg0, %c0_i32 : i32, i32
  }
  func.func @transform_1(%arg0: i32) -> (i32, i32) {
    %c0_i32 = arith.constant 0 : i32
    %c0_i32_0 = arith.constant 0 : i32
    %c0_i32_1 = arith.constant 0 : i32
    return %c0_i32, %c0_i32_0 : i32, i32
  }
  func.func @transform_2(%arg0: i32) -> (i32, i32) {
    %c0_i32 = arith.constant 0 : i32
    %c0_i32_0 = arith.constant 0 : i32
    %c0_i32_1 = arith.constant 0 : i32
    return %c0_i32, %c0_i32_0 : i32, i32
  }
  func.func @transform_3(%arg0: i32) -> (i32, i32) {
    %c0_i32 = arith.constant 0 : i32
    %c0_i32_0 = arith.constant 0 : i32
    %c0_i32_1 = arith.constant 0 : i32
    return %c0_i32, %c0_i32_0 : i32, i32
  }
  func.func @transform_4(%arg0: i32) -> (i32, i32) {
    %c0_i32 = arith.constant 0 : i32
    %c0_i32_0 = arith.constant 0 : i32
    %c0_i32_1 = arith.constant 0 : i32
    return %c0_i32, %c0_i32_0 : i32, i32
  }
  func.func @transform_5(%arg0: i32) -> (i32, i32) {
    %c0_i32 = arith.constant 0 : i32
    %c0_i32_0 = arith.constant 0 : i32
    %c0_i32_1 = arith.constant 0 : i32
    return %c0_i32, %c0_i32_0 : i32, i32
  }
  func.func @transform_6(%arg0: i32) -> (i32, i32) {
    %c0_i32 = arith.constant 0 : i32
    %c0_i32_0 = arith.constant 0 : i32
    %c0_i32_1 = arith.constant 0 : i32
    return %c0_i32, %c0_i32_0 : i32, i32
  }
  func.func @transform_7(%arg0: i32) -> (i32, i32) {
    %c0_i32 = arith.constant 0 : i32
    %c0_i32_0 = arith.constant 0 : i32
    return %arg0, %c0_i32 : i32, i32
  }
}

</mosaic_0001>

<llo_original>
// kernel: tpu_custom_call.1
$region0: #{tpu_custom_call.1}
  #allocation0 [shape = 'u32[]', space=smem, size = 0x4, offset = 0x4, fixed_abs, tag = 'smem constant byte address 0x4 - core index']
  #allocation1 [shape = 'u32[144,128]{1,0:T(1,128)}', space=vmem, size = 0x12000, scoped, tag = 'internal scratch']
  %s0 = inlined_call_operand.hbm [shape: f32[32,784], index: 0, kind: input, shape index: {}]
  %s1 = inlined_call_operand.hbm [shape: bf16[784,128], index: 1, kind: input, shape index: {}]
  %s2 = inlined_call_operand.vmem [shape: f32[1,128], index: 2, kind: input, shape index: {}]
  %s3 = inlined_call_operand.vmem [shape: bf16[128,64], index: 3, kind: input, shape index: {}]
  %s4 = inlined_call_operand.vmem [shape: f32[1,64], index: 4, kind: input, shape index: {}]
  %s5 = inlined_call_operand.vmem [shape: bf16[64,128], index: 5, kind: input, shape index: {}]
  %s6 = inlined_call_operand.vmem [shape: f32[1,128], index: 6, kind: input, shape index: {}]
  %s7 = inlined_call_operand.hbm [shape: bf16[32,128], index: 7, kind: output, shape index: {}]
  %s8 = sld [smem:[#allocation0]]
  $region46: #{tpu_custom_call.1} parent=0
    _
  %s10 = ssub.s32 1, %s8
  %s11 = scalar_select 0, %s10, %s8
  $region1: #{tpu_custom_call.1} parent=0
    #allocation2 [shape = 'u8[114688]{0}', space=vmem, size = 0x1c000, scoped, tag = 'input window, operand 0, single buffered']
    #allocation3 [shape = 's32[1]{0}', space=sflag, size = 0x4, scoped, tag = 'scoped memory for tpu_custom_call.1']
    #allocation4 [shape = 's32[1]{0}', space=sflag, size = 0x4, scoped, tag = 'scoped memory for tpu_custom_call.1']
    #allocation5 [shape = 'u8[200704]{0}', space=vmem, size = 0x31000, scoped, tag = 'input window, operand 1, single buffered']
    #allocation6 [shape = 's32[1]{0}', space=sflag, size = 0x4, scoped, tag = 'scoped memory for tpu_custom_call.1']
    #allocation7 [shape = 'u8[8192]{0}', space=vmem, size = 0x2000, scoped, tag = 'output window, operand 0, single buffered']
    %12 = vsyncpa [#allocation3], 0
    %13 = vsyncpa [#allocation6], 0
    %14 = vsyncpa [#allocation4], 0
    // Predicated region
    $region2: #{tpu_custom_call.1} parent=1 // pred_check
      _
    $region3: #{tpu_custom_call.1} parent=1 // pred_check_branch
      %16 = sbr.rel (0) target = $region5
    $region4: #{tpu_custom_call.1} parent=1 // pred_region
      %s18 = ssub.s32 3584, 3584
      %19 = vsyncadd [#allocation3], %s18
      %s20 = sshll.u32 [#allocation2], 4
      %s21 = int_to_ptr.vmem [resolvable:$true] %s20
      %26 = dma.hbm_to_vmem [thread:$0]  %s0, 3584, %s21, [#allocation3], 896, 896, 56
    $region5: #{tpu_custom_call.1} parent=1 // pred_fallthru
      _
    // Predicated region
    $region6: #{tpu_custom_call.1} parent=1 // pred_check
      _
    $region7: #{tpu_custom_call.1} parent=1 // pred_check_branch
      %28 = sbr.rel (0) target = $region9
    $region8: #{tpu_custom_call.1} parent=1 // pred_region
      %s30 = ssub.s32 6272, 6272
      %31 = vsyncadd [#allocation6], %s30
      %s32 = sshll.u32 [#allocation5], 4
      %s33 = int_to_ptr.vmem [resolvable:$true] %s32
      %38 = dma.hbm_to_vmem [thread:$0]  %s1, 6272, %s33, [#allocation6], 64, 64, 4
    $region9: #{tpu_custom_call.1} parent=1 // pred_fallthru
      _
    // Predicated region
    $region10: #{tpu_custom_call.1} parent=1 // pred_check
      _
    $region11: #{tpu_custom_call.1} parent=1 // pred_check_branch
      %40 = sbr.rel (0) target = $region13
    $region12: #{tpu_custom_call.1} parent=1 // pred_region
      _
    $region13: #{tpu_custom_call.1} parent=1 // pred_fallthru
      _
    // Predicated region
    $region14: #{tpu_custom_call.1} parent=1 // pred_check
      _
    $region15: #{tpu_custom_call.1} parent=1 // pred_check_branch
      %42 = sbr.rel (0) target = $region17
    $region16: #{tpu_custom_call.1} parent=1 // pred_region
      _
    $region17: #{tpu_custom_call.1} parent=1 // pred_fallthru
      _
    // Predicated region
    $region18: #{tpu_custom_call.1} parent=1 // pred_check
      _
    $region19: #{tpu_custom_call.1} parent=1 // pred_check_branch
      %44 = sbr.rel (0) target = $region21
    $region20: #{tpu_custom_call.1} parent=1 // pred_region
      _
    $region21: #{tpu_custom_call.1} parent=1 // pred_fallthru
      _
    // Predicated region
    $region22: #{tpu_custom_call.1} parent=1 // pred_check
      _
    $region23: #{tpu_custom_call.1} parent=1 // pred_check_branch
      %46 = sbr.rel (0) target = $region25
    $region24: #{tpu_custom_call.1} parent=1 // pred_region
      _
    $region25: #{tpu_custom_call.1} parent=1 // pred_fallthru
      _
    // Predicated region
    $region26: #{tpu_custom_call.1} parent=1 // pred_check
      _
    $region27: #{tpu_custom_call.1} parent=1 // pred_check_branch
      %48 = sbr.rel (0) target = $region29
    $region28: #{tpu_custom_call.1} parent=1 // pred_region
      _
    $region29: #{tpu_custom_call.1} parent=1 // pred_fallthru
      _
    // Predicated region
    $region30: #{tpu_custom_call.1} parent=1 // pred_check
      _
    $region31: #{tpu_custom_call.1} parent=1 // pred_check_branch
      %50 = sbr.rel (0) target = $region33
    $region32: #{tpu_custom_call.1} parent=1 // pred_region
      %51 = dma.done [#allocation3], 3584
    $region33: #{tpu_custom_call.1} parent=1 // pred_fallthru
      _
    // Predicated region
    $region34: #{tpu_custom_call.1} parent=1 // pred_check
      _
    $region35: #{tpu_custom_call.1} parent=1 // pred_check_branch
      %53 = sbr.rel (0) target = $region37
    $region36: #{tpu_custom_call.1} parent=1 // pred_region
      %54 = dma.done [#allocation6], 6272
    $region37: #{tpu_custom_call.1} parent=1 // pred_fallthru
      _
    %v56 = vld [vmem:[#allocation2] sm:$0xff]
    %v57 = vld [vmem:[#allocation2 + $0x8] sm:$0xff]
    %v58 = vld [vmem:[#allocation2 + $0x10] sm:$0xff]
    %v59 = vld [vmem:[#allocation2 + $0x18] sm:$0xff]
    %v60 = vld [vmem:[#allocation2 + $0x20] sm:$0xff]
    %v61 = vld [vmem:[#allocation2 + $0x28] sm:$0xff]
    %v62 = vld [vmem:[#allocation2 + $0x30] sm:$0xff]
    %v63 = vld [vmem:[#allocation2 + $0x38] sm:$0xff]
    %v64 = vld [vmem:[#allocation2 + $0x40] sm:$0xff]
    %v65 = vld [vmem:[#allocation2 + $0x48] sm:$0xff]
    %v66 = vld [vmem:[#allocation2 + $0x50] sm:$0xff]
    %v67 = vld [vmem:[#allocation2 + $0x58] sm:$0xff]
    %v68 = vld [vmem:[#allocation2 + $0x60] sm:$0xff]
    %v69 = vld [vmem:[#allocation2 + $0x68] sm:$0xff]
    %v70 = vld [vmem:[#allocation2 + $0x70] sm:$0xff]
    %v71 = vld [vmem:[#allocation2 + $0x78] sm:$0xff]
    %v72 = vld [vmem:[#allocation2 + $0x80] sm:$0xff]
    %v73 = vld [vmem:[#allocation2 + $0x88] sm:$0xff]
    %v74 = vld [vmem:[#allocation2 + $0x90] sm:$0xff]
    %v75 = vld [vmem:[#allocation2 + $0x98] sm:$0xff]
    %v76 = vld [vmem:[#allocation2 + $0xa0] sm:$0xff]
    %v77 = vld [vmem:[#allocation2 + $0xa8] sm:$0xff]
    %v78 = vld [vmem:[#allocation2 + $0xb0] sm:$0xff]
    %v79 = vld [vmem:[#allocation2 + $0xb8] sm:$0xff]
    %v80 = vld [vmem:[#allocation2 + $0xc0] sm:$0xff]
    %v81 = vld [vmem:[#allocation2 + $0xc8] sm:$0xff]
    %v82 = vld [vmem:[#allocation2 + $0xd0] sm:$0xff]
    %v83 = vld [vmem:[#allocation2 + $0xd8] sm:$0xff]
    %v84 = vpack.c.bf16 %v63, %v56
    %v85 = vpack.c.bf16 %v64, %v57
    %v86 = vpack.c.bf16 %v65, %v58
    %v87 = vpack.c.bf16 %v66, %v59
    %v88 = vpack.c.bf16 %v67, %v60
    %v89 = vpack.c.bf16 %v68, %v61
    %v90 = vpack.c.bf16 %v69, %v62
    %v91 = vpack.c.bf16 %v77, %v70
    %v92 = vpack.c.bf16 %v78, %v71
    %v93 = vpack.c.bf16 %v79, %v72
    %v94 = vpack.c.bf16 %v80, %v73
    %v95 = vpack.c.bf16 %v81, %v74
    %v96 = vpack.c.bf16 %v82, %v75
    %v97 = vpack.c.bf16 %v83, %v76
    %v98 = vld [vmem:[#allocation5] sm:$0xf]
    %v99 = vld [vmem:[#allocation5 + $0x4] sm:$0xf]
    %v100 = vld [vmem:[#allocation5 + $0x8] sm:$0xf]
    %v101 = vld [vmem:[#allocation5 + $0xc] sm:$0xf]
    %v102 = vld [vmem:[#allocation5 + $0x10] sm:$0xf]
    %v103 = vld [vmem:[#allocation5 + $0x14] sm:$0xf]
    %v104 = vld [vmem:[#allocation5 + $0x18] sm:$0xf]
    %v105 = vld [vmem:[#allocation5 + $0x1c] sm:$0xf]
    %v106 = vld [vmem:[#allocation5 + $0x20] sm:$0xf]
    %v107 = vld [vmem:[#allocation5 + $0x24] sm:$0xf]
    %v108 = vld [vmem:[#allocation5 + $0x28] sm:$0xf]
    %v109 = vld [vmem:[#allocation5 + $0x2c] sm:$0xf]
    %v110 = vld [vmem:[#allocation5 + $0x30] sm:$0xf]
    %v111 = vld [vmem:[#allocation5 + $0x34] sm:$0xf]
    %v112 = vld [vmem:[#allocation5 + $0x38] sm:$0xf]
    %v113 = vld [vmem:[#allocation5 + $0x3c] sm:$0xf]
    %v114 = vld [vmem:[#allocation5 + $0x40] sm:$0xf]
    %v115 = vld [vmem:[#allocation5 + $0x44] sm:$0xf]
    %v116 = vld [vmem:[#allocation5 + $0x48] sm:$0xf]
    %v117 = vld [vmem:[#allocation5 + $0x4c] sm:$0xf]
    %v118 = vld [vmem:[#allocation5 + $0x50] sm:$0xf]
    %v119 = vld [vmem:[#allocation5 + $0x54] sm:$0xf]
    %v120 = vld [vmem:[#allocation5 + $0x58] sm:$0xf]
    %v121 = vld [vmem:[#allocation5 + $0x5c] sm:$0xf]
    %v122 = vld [vmem:[#allocation5 + $0x60] sm:$0xf]
    %v123 = vld [vmem:[#allocation5 + $0x64] sm:$0xf]
    %v124 = vld [vmem:[#allocation5 + $0x68] sm:$0xf]
    %v125 = vld [vmem:[#allocation5 + $0x6c] sm:$0xf]
    %v126 = vld [vmem:[#allocation5 + $0x70] sm:$0xf]
    %v127 = vld [vmem:[#allocation5 + $0x74] sm:$0xf]
    %v128 = vld [vmem:[#allocation5 + $0x78] sm:$0xf]
    %v129 = vld [vmem:[#allocation5 + $0x7c] sm:$0xf]
    %v130 = vld [vmem:[#allocation5 + $0x80] sm:$0xf]
    %v131 = vld [vmem:[#allocation5 + $0x84] sm:$0xf]
    %v132 = vld [vmem:[#allocation5 + $0x88] sm:$0xf]
    %v133 = vld [vmem:[#allocation5 + $0x8c] sm:$0xf]
    %v134 = vld [vmem:[#allocation5 + $0x90] sm:$0xf]
    %v135 = vld [vmem:[#allocation5 + $0x94] sm:$0xf]
    %v136 = vld [vmem:[#allocation5 + $0x98] sm:$0xf]
    %v137 = vld [vmem:[#allocation5 + $0x9c] sm:$0xf]
    %v138 = vld [vmem:[#allocation5 + $0xa0] sm:$0xf]
    %v139 = vld [vmem:[#allocation5 + $0xa4] sm:$0xf]
    %v140 = vld [vmem:[#allocation5 + $0xa8] sm:$0xf]
    %v141 = vld [vmem:[#allocation5 + $0xac] sm:$0xf]
    %v142 = vld [vmem:[#allocation5 + $0xb0] sm:$0xf]
    %v143 = vld [vmem:[#allocation5 + $0xb4] sm:$0xf]
    %v144 = vld [vmem:[#allocation5 + $0xb8] sm:$0xf]
    %v145 = vld [vmem:[#allocation5 + $0xbc] sm:$0xf]
    %v146 = vld [vmem:[#allocation5 + $0xc0] sm:$0xf]
    %v147 = vld [vmem:[#allocation5 + $0xc4] sm:$0xf]
    %v148 = vld [vmem:[#allocation5 + $0xc8] sm:$0xf]
    %v149 = vld [vmem:[#allocation5 + $0xcc] sm:$0xf]
    %v150 = vld [vmem:[#allocation5 + $0xd0] sm:$0xf]
    %v151 = vld [vmem:[#allocation5 + $0xd4] sm:$0xf]
    %v152 = vld [vmem:[#allocation5 + $0xd8] sm:$0xf]
    %v153 = vld [vmem:[#allocation5 + $0xdc] sm:$0xf]
    %v154 = vld [vmem:[#allocation5 + $0xe0] sm:$0xf]
    %v155 = vld [vmem:[#allocation5 + $0xe4] sm:$0xf]
    %v156 = vld [vmem:[#allocation5 + $0xe8] sm:$0xf]
    %v157 = vld [vmem:[#allocation5 + $0xec] sm:$0xf]
    %v158 = vld [vmem:[#allocation5 + $0xf0] sm:$0xf]
    %v159 = vld [vmem:[#allocation5 + $0xf4] sm:$0xf]
    %v160 = vld [vmem:[#allocation5 + $0xf8] sm:$0xf]
    %v161 = vld [vmem:[#allocation5 + $0xfc] sm:$0xf]
    %v162 = vld [vmem:[#allocation5 + $0x100] sm:$0xf]
    %v163 = vld [vmem:[#allocation5 + $0x104] sm:$0xf]
    %v164 = vld [vmem:[#allocation5 + $0x108] sm:$0xf]
    %v165 = vld [vmem:[#allocation5 + $0x10c] sm:$0xf]
    %v166 = vld [vmem:[#allocation5 + $0x110] sm:$0xf]
    %v167 = vld [vmem:[#allocation5 + $0x114] sm:$0xf]
    %v168 = vld [vmem:[#allocation5 + $0x118] sm:$0xf]
    %v169 = vld [vmem:[#allocation5 + $0x11c] sm:$0xf]
    %v170 = vld [vmem:[#allocation5 + $0x120] sm:$0xf]
    %v171 = vld [vmem:[#allocation5 + $0x124] sm:$0xf]
    %v172 = vld [vmem:[#allocation5 + $0x128] sm:$0xf]
    %v173 = vld [vmem:[#allocation5 + $0x12c] sm:$0xf]
    %v174 = vld [vmem:[#allocation5 + $0x130] sm:$0xf]
    %v175 = vld [vmem:[#allocation5 + $0x134] sm:$0xf]
    %v176 = vld [vmem:[#allocation5 + $0x138] sm:$0xf]
    %v177 = vld [vmem:[#allocation5 + $0x13c] sm:$0xf]
    %v178 = vld [vmem:[#allocation5 + $0x140] sm:$0xf]
    %v179 = vld [vmem:[#allocation5 + $0x144] sm:$0xf]
    %v180 = vld [vmem:[#allocation5 + $0x148] sm:$0xf]
    %v181 = vld [vmem:[#allocation5 + $0x14c] sm:$0xf]
    %v182 = vld [vmem:[#allocation5 + $0x150] sm:$0xf]
    %v183 = vld [vmem:[#allocation5 + $0x154] sm:$0xf]
    %v184 = vld [vmem:[#allocation5 + $0x158] sm:$0xf]
    %v185 = vld [vmem:[#allocation5 + $0x15c] sm:$0xf]
    %v186 = vld [vmem:[#allocation5 + $0x160] sm:$0xf]
    %v187 = vld [vmem:[#allocation5 + $0x164] sm:$0xf]
    %v188 = vld [vmem:[#allocation5 + $0x168] sm:$0xf]
    %v189 = vld [vmem:[#allocation5 + $0x16c] sm:$0xf]
    %v190 = vld [vmem:[#allocation5 + $0x170] sm:$0xf]
    %v191 = vld [vmem:[#allocation5 + $0x174] sm:$0xf]
    %v192 = vld [vmem:[#allocation5 + $0x178] sm:$0xf]
    %v193 = vld [vmem:[#allocation5 + $0x17c] sm:$0xf]
    %v194 = vld [vmem:[#allocation5 + $0x180] sm:$0xf]
    %v195 = vld [vmem:[#allocation5 + $0x184] sm:$0xf]
    %v196 = vld [vmem:[%s2] sm:$0x1]
    %v198 = vlaneseq
    %v199 = vshrl.u32 %v198, 7
    %v200 = vsub.s32 0, %v199
    %v201 = vrot.slane %v196, %v200
    %v301 = vunpack.c.l.b16 %v98
    %v302 = vunpack.c.l.b16 %v99
    %v303 = vunpack.c.l.b16 %v100
    %v304 = vunpack.c.l.b16 %v101
    %v305 = vunpack.c.l.b16 %v102
    %v306 = vunpack.c.l.b16 %v103
    %v307 = vunpack.c.l.b16 %v104
    %v308 = vunpack.c.l.b16 %v105
    %v309 = vunpack.c.l.b16 %v106
    %v310 = vunpack.c.l.b16 %v107
    %v311 = vunpack.c.l.b16 %v108
    %v312 = vunpack.c.l.b16 %v109
    %v313 = vunpack.c.l.b16 %v110
    %v314 = vunpack.c.l.b16 %v111
    %v315 = vunpack.c.l.b16 %v112
    %v316 = vunpack.c.l.b16 %v113
    %v317 = vunpack.c.l.b16 %v114
    %v318 = vunpack.c.l.b16 %v115
    %v319 = vunpack.c.l.b16 %v116
    %v320 = vunpack.c.l.b16 %v117
    %v321 = vunpack.c.l.b16 %v118
    %v322 = vunpack.c.l.b16 %v119
    %v323 = vunpack.c.l.b16 %v120
    %v324 = vunpack.c.l.b16 %v121
    %v325 = vunpack.c.l.b16 %v122
    %v326 = vunpack.c.l.b16 %v123
    %v327 = vunpack.c.l.b16 %v124
    %v328 = vunpack.c.l.b16 %v125
    %v329 = vunpack.c.l.b16 %v126
    %v330 = vunpack.c.l.b16 %v127
    %v331 = vunpack.c.l.b16 %v128
    %v332 = vunpack.c.l.b16 %v129
    %v333 = vunpack.c.l.b16 %v130
    %v334 = vunpack.c.l.b16 %v131
    %v335 = vunpack.c.l.b16 %v132
    %v336 = vunpack.c.l.b16 %v133
    %v337 = vunpack.c.l.b16 %v134
    %v338 = vunpack.c.l.b16 %v135
    %v339 = vunpack.c.l.b16 %v136
    %v340 = vunpack.c.l.b16 %v137
    %v341 = vunpack.c.l.b16 %v138
    %v342 = vunpack.c.l.b16 %v139
    %v343 = vunpack.c.l.b16 %v140
    %v344 = vunpack.c.l.b16 %v141
    %v345 = vunpack.c.l.b16 %v142
    %v346 = vunpack.c.l.b16 %v143
    %v347 = vunpack.c.l.b16 %v144
    %v348 = vunpack.c.l.b16 %v145
    %v349 = vunpack.c.l.b16 %v146
    %v350 = vunpack.c.l.b16 %v147
    %v351 = vunpack.c.l.b16 %v148
    %v352 = vunpack.c.l.b16 %v149
    %v353 = vunpack.c.l.b16 %v150
    %v354 = vunpack.c.l.b16 %v151
    %v355 = vunpack.c.l.b16 %v152
    %v356 = vunpack.c.l.b16 %v153
    %v357 = vunpack.c.l.b16 %v154
    %v358 = vunpack.c.l.b16 %v155
    %v359 = vunpack.c.l.b16 %v156
    %v360 = vunpack.c.l.b16 %v157
    %v361 = vunpack.c.l.b16 %v158
    %v362 = vunpack.c.l.b16 %v159
    %v363 = vunpack.c.l.b16 %v160
    %v364 = vunpack.c.l.b16 %v161
    %v365 = vunpack.c.l.b16 %v162
    %v366 = vunpack.c.l.b16 %v163
    %v367 = vunpack.c.l.b16 %v164
    %v368 = vunpack.c.l.b16 %v165
    %v369 = vunpack.c.l.b16 %v166
    %v370 = vunpack.c.l.b16 %v167
    %v371 = vunpack.c.l.b16 %v168
    %v372 = vunpack.c.l.b16 %v169
    %v373 = vunpack.c.l.b16 %v170
    %v374 = vunpack.c.l.b16 %v171
    %v375 = vunpack.c.l.b16 %v172
    %v376 = vunpack.c.l.b16 %v173
    %v377 = vunpack.c.l.b16 %v174
    %v378 = vunpack.c.l.b16 %v175
    %v379 = vunpack.c.l.b16 %v176
    %v380 = vunpack.c.l.b16 %v177
    %v381 = vunpack.c.l.b16 %v178
    %v382 = vunpack.c.l.b16 %v179
    %v383 = vunpack.c.l.b16 %v180
    %v384 = vunpack.c.l.b16 %v181
    %v385 = vunpack.c.l.b16 %v182
    %v386 = vunpack.c.l.b16 %v183
    %v387 = vunpack.c.l.b16 %v184
    %v388 = vunpack.c.l.b16 %v185
    %v389 = vunpack.c.l.b16 %v186
    %v390 = vunpack.c.l.b16 %v187
    %v391 = vunpack.c.l.b16 %v188
    %v392 = vunpack.c.l.b16 %v189
    %v393 = vunpack.c.l.b16 %v190
    %v394 = vunpack.c.l.b16 %v191
    %v395 = vunpack.c.l.b16 %v192
    %v396 = vunpack.c.l.b16 %v193
    %v397 = vunpack.c.l.b16 %v194
    %v398 = vunpack.c.l.b16 %v195
    %v399 = vpack.c.b16 %v302, %v301
    %v400 = vpack.c.b16 %v304, %v303
    %v401 = vpack.c.b16 %v306, %v305
    %v402 = vpack.c.b16 %v308, %v307
    %v403 = vpack.c.b16 %v310, %v309
    %v404 = vpack.c.b16 %v312, %v311
    %v405 = vpack.c.b16 %v314, %v313
    %v406 = vpack.c.b16 %v316, %v315
    %v407 = vpack.c.b16 %v318, %v317
    %v408 = vpack.c.b16 %v320, %v319
    %v409 = vpack.c.b16 %v322, %v321
    %v410 = vpack.c.b16 %v324, %v323
    %v411 = vpack.c.b16 %v326, %v325
    %v412 = vpack.c.b16 %v328, %v327
    %v413 = vpack.c.b16 %v330, %v329
    %v414 = vpack.c.b16 %v332, %v331
    %v415 = vpack.c.b16 %v334, %v333
    %v416 = vpack.c.b16 %v336, %v335
    %v417 = vpack.c.b16 %v338, %v337
    %v418 = vpack.c.b16 %v340, %v339
    %v419 = vpack.c.b16 %v342, %v341
    %v420 = vpack.c.b16 %v344, %v343
    %v421 = vpack.c.b16 %v346, %v345
    %v422 = vpack.c.b16 %v348, %v347
    %v423 = vpack.c.b16 %v350, %v349
    %v424 = vpack.c.b16 %v352, %v351
    %v425 = vpack.c.b16 %v354, %v353
    %v426 = vpack.c.b16 %v356, %v355
    %v427 = vpack.c.b16 %v358, %v357
    %v428 = vpack.c.b16 %v360, %v359
    %v429 = vpack.c.b16 %v362, %v361
    %v430 = vpack.c.b16 %v364, %v363
    %v431 = vpack.c.b16 %v366, %v365
    %v432 = vpack.c.b16 %v368, %v367
    %v433 = vpack.c.b16 %v370, %v369
    %v434 = vpack.c.b16 %v372, %v371
    %v435 = vpack.c.b16 %v374, %v373
    %v436 = vpack.c.b16 %v376, %v375
    %v437 = vpack.c.b16 %v378, %v377
    %v438 = vpack.c.b16 %v380, %v379
    %v439 = vpack.c.b16 %v382, %v381
    %v440 = vpack.c.b16 %v384, %v383
    %v441 = vpack.c.b16 %v386, %v385
    %v442 = vpack.c.b16 %v388, %v387
    %v443 = vpack.c.b16 %v390, %v389
    %v444 = vpack.c.b16 %v392, %v391
    %v445 = vpack.c.b16 %v394, %v393
    %v446 = vpack.c.b16 %v396, %v395
    %v447 = vpack.c.b16 %v398, %v397
    %vm497 = vcmask 130048
    %v499 = vsel %vm497, %v90, 0
    %v502 = vsel %vm497, %v97, 0
    %504 = vmatprep.subr.bf16.mxu0 0
    %505 = vmatpush1.bf16.msra.mxu0 %v399
    %506 = vmatprep.subr.bf16.mxu0 0
    %507 = vmatpush1.bf16.msra.mxu0 %v400
    %508 = vmatprep.subr.bf16.mxu0 0
    %509 = vmatpush1.bf16.msra.mxu0 %v401
    %510 = vmatprep.subr.bf16.mxu0 0
    %511 = vmatpush1.bf16.msra.mxu0 %v402
    %512 = vmatprep.subr.bf16.mxu0 0
    %513 = vmatpush1.bf16.msra.mxu0 %v403
    %514 = vmatprep.subr.bf16.mxu0 0
    %515 = vmatpush1.bf16.msra.mxu0 %v404
    %516 = vmatprep.subr.bf16.mxu0 0
    %517 = vmatpush1.bf16.msra.mxu0 %v405
    %518 = vmatprep.subr.bf16.mxu0 0
    %519 = vmatpush1.bf16.msra.mxu0 %v406
    %520 = vmatprep.subr.bf16.mxu0 0
    %521 = vmatpush1.bf16.msra.mxu0 %v407
    %522 = vmatprep.subr.bf16.mxu0 0
    %523 = vmatpush1.bf16.msra.mxu0 %v408
    %524 = vmatprep.subr.bf16.mxu0 0
    %525 = vmatpush1.bf16.msra.mxu0 %v409
    %526 = vmatprep.subr.bf16.mxu0 0
    %527 = vmatpush1.bf16.msra.mxu0 %v410
    %528 = vmatprep.subr.bf16.mxu0 0
    %529 = vmatpush1.bf16.msra.mxu0 %v411
    %530 = vmatprep.subr.bf16.mxu0 0
    %531 = vmatpush1.bf16.msra.mxu0 %v412
    %532 = vmatprep.subr.bf16.mxu0 0
    %533 = vmatpush1.bf16.msra.mxu0 %v413
    %534 = vmatprep.subr.bf16.mxu0 0
    %535 = vmatpush1.bf16.msra.mxu0 %v414
    %536 = vmatprep.mubr.bf16.mxu0 %v85
    %537 = vmatmul.mubr.bf16.gmra.mrb[0].mxu0 %v84
    %v538 = vpop.f32.mrb[0].mxu0
    %v539 = vadd.f32 %v201, %v538
    %v540 = vpop.f32.mrb[0].mxu0
    %v541 = vpop.f32.mrb[0].mxu0
    %v542 = vadd.f32 %v201, %v541
    %v543 = vpop.f32.mrb[0].mxu0
    %544 = vmatprep.mubr.bf16.mxu0 %v92
    %545 = vmatmul.mubr.bf16.gmra.mrb[0].mxu0 %v91
    %v546 = vpop.f32.mrb[0].mxu0
    %v547 = vadd.f32 %v201, %v546
    %v548 = vpop.f32.mrb[0].mxu0
    %v549 = vpop.f32.mrb[0].mxu0
    %v550 = vadd.f32 %v201, %v549
    %v551 = vpop.f32.mrb[0].mxu0
    %552 = vdwg.mxu0
    %553 = vmatprep.subr.bf16.mxu0 0
    %554 = vmatpush1.bf16.msra.mxu0 %v415
    %555 = vmatprep.subr.bf16.mxu0 0
    %556 = vmatpush1.bf16.msra.mxu0 %v416
    %557 = vmatprep.subr.bf16.mxu0 0
    %558 = vmatpush1.bf16.msra.mxu0 %v417
    %559 = vmatprep.subr.bf16.mxu0 0
    %560 = vmatpush1.bf16.msra.mxu0 %v418
    %561 = vmatprep.subr.bf16.mxu0 0
    %562 = vmatpush1.bf16.msra.mxu0 %v419
    %563 = vmatprep.subr.bf16.mxu0 0
    %564 = vmatpush1.bf16.msra.mxu0 %v420
    %565 = vmatprep.subr.bf16.mxu0 0
    %566 = vmatpush1.bf16.msra.mxu0 %v421
    %567 = vmatprep.subr.bf16.mxu0 0
    %568 = vmatpush1.bf16.msra.mxu0 %v422
    %569 = vmatprep.subr.bf16.mxu0 0
    %570 = vmatpush1.bf16.msra.mxu0 %v423
    %571 = vmatprep.subr.bf16.mxu0 0
    %572 = vmatpush1.bf16.msra.mxu0 %v424
    %573 = vmatprep.subr.bf16.mxu0 0
    %574 = vmatpush1.bf16.msra.mxu0 %v425
    %575 = vmatprep.subr.bf16.mxu0 0
    %576 = vmatpush1.bf16.msra.mxu0 %v426
    %577 = vmatprep.subr.bf16.mxu0 0
    %578 = vmatpush1.bf16.msra.mxu0 %v427
    %579 = vmatprep.subr.bf16.mxu0 0
    %580 = vmatpush1.bf16.msra.mxu0 %v428
    %581 = vmatprep.subr.bf16.mxu0 0
    %582 = vmatpush1.bf16.msra.mxu0 %v429
    %583 = vmatprep.subr.bf16.mxu0 0
    %584 = vmatpush1.bf16.msra.mxu0 %v430
    %585 = vmatprep.mubr.bf16.mxu0 %v87
    %586 = vmatmul.mubr.bf16.gmra.mrb[0].mxu0 %v86
    %v587 = vpop.f32.mrb[0].mxu0
    %v588 = vadd.f32 %v539, %v587
    %v589 = vpop.f32.mrb[0].mxu0
    %v590 = vpop.f32.mrb[0].mxu0
    %v591 = vadd.f32 %v542, %v590
    %v592 = vpop.f32.mrb[0].mxu0
    %593 = vmatprep.mubr.bf16.mxu0 %v94
    %594 = vmatmul.mubr.bf16.gmra.mrb[0].mxu0 %v93
    %v595 = vpop.f32.mrb[0].mxu0
    %v596 = vadd.f32 %v547, %v595
    %v597 = vpop.f32.mrb[0].mxu0
    %v598 = vpop.f32.mrb[0].mxu0
    %v599 = vadd.f32 %v550, %v598
    %v600 = vpop.f32.mrb[0].mxu0
    %601 = vdwg.mxu0
    %602 = vmatprep.subr.bf16.mxu0 0
    %603 = vmatpush1.bf16.msra.mxu0 %v431
    %604 = vmatprep.subr.bf16.mxu0 0
    %605 = vmatpush1.bf16.msra.mxu0 %v432
    %606 = vmatprep.subr.bf16.mxu0 0
    %607 = vmatpush1.bf16.msra.mxu0 %v433
    %608 = vmatprep.subr.bf16.mxu0 0
    %609 = vmatpush1.bf16.msra.mxu0 %v434
    %610 = vmatprep.subr.bf16.mxu0 0
    %611 = vmatpush1.bf16.msra.mxu0 %v435
    %612 = vmatprep.subr.bf16.mxu0 0
    %613 = vmatpush1.bf16.msra.mxu0 %v436
    %614 = vmatprep.subr.bf16.mxu0 0
    %615 = vmatpush1.bf16.msra.mxu0 %v437
    %616 = vmatprep.subr.bf16.mxu0 0
    %617 = vmatpush1.bf16.msra.mxu0 %v438
    %618 = vmatprep.subr.bf16.mxu0 0
    %619 = vmatpush1.bf16.msra.mxu0 %v439
    %620 = vmatprep.subr.bf16.mxu0 0
    %621 = vmatpush1.bf16.msra.mxu0 %v440
    %622 = vmatprep.subr.bf16.mxu0 0
    %623 = vmatpush1.bf16.msra.mxu0 %v441
    %624 = vmatprep.subr.bf16.mxu0 0
    %625 = vmatpush1.bf16.msra.mxu0 %v442
    %626 = vmatprep.subr.bf16.mxu0 0
    %627 = vmatpush1.bf16.msra.mxu0 %v443
    %628 = vmatprep.subr.bf16.mxu0 0
    %629 = vmatpush1.bf16.msra.mxu0 %v444
    %630 = vmatprep.subr.bf16.mxu0 0
    %631 = vmatpush1.bf16.msra.mxu0 %v445
    %632 = vmatprep.subr.bf16.mxu0 0
    %633 = vmatpush1.bf16.msra.mxu0 %v446
    %634 = vmatprep.mubr.bf16.mxu0 %v89
    %635 = vmatmul.mubr.bf16.gmra.mrb[0].mxu0 %v88
    %v636 = vpop.f32.mrb[0].mxu0
    %v637 = vadd.f32 %v588, %v636
    %v638 = vpop.f32.mrb[0].mxu0
    %v639 = vpop.f32.mrb[0].mxu0
    %v640 = vadd.f32 %v591, %v639
    %v641 = vpop.f32.mrb[0].mxu0
    %642 = vmatprep.mubr.bf16.mxu0 %v96
    %643 = vmatmul.mubr.bf16.gmra.mrb[0].mxu0 %v95
    %v644 = vpop.f32.mrb[0].mxu0
    %v645 = vadd.f32 %v596, %v644
    %v646 = vpop.f32.mrb[0].mxu0
    %v647 = vpop.f32.mrb[0].mxu0
    %v648 = vadd.f32 %v599, %v647
    %v649 = vpop.f32.mrb[0].mxu0
    %650 = vdwg.mxu0
    %651 = vmatprep.subr.bf16.mxu0 0
    %652 = vmatpush1.bf16.msra.mxu0 %v447
    %653 = vmatprep.subr.bf16.mxu0 0
    %654 = vmatpush1.bf16.msra.mxu0 0
    %655 = vmatprep.subr.bf16.mxu0 0
    %656 = vmatpush1.bf16.msra.mxu0 0
    %657 = vmatprep.subr.bf16.mxu0 0
    %658 = vmatpush1.bf16.msra.mxu0 0
    %659 = vmatprep.subr.bf16.mxu0 0
    %660 = vmatpush1.bf16.msra.mxu0 0
    %661 = vmatprep.subr.bf16.mxu0 0
    %662 = vmatpush1.bf16.msra.mxu0 0
    %663 = vmatprep.subr.bf16.mxu0 0
    %664 = vmatpush1.bf16.msra.mxu0 0
    %665 = vmatprep.subr.bf16.mxu0 0
    %666 = vmatpush1.bf16.msra.mxu0 0
    %667 = vmatprep.subr.bf16.mxu0 0
    %668 = vmatpush1.bf16.msra.mxu0 0
    %669 = vmatprep.subr.bf16.mxu0 0
    %670 = vmatpush1.bf16.msra.mxu0 0
    %671 = vmatprep.subr.bf16.mxu0 0
    %672 = vmatpush1.bf16.msra.mxu0 0
    %673 = vmatprep.subr.bf16.mxu0 0
    %674 = vmatpush1.bf16.msra.mxu0 0
    %675 = vmatprep.subr.bf16.mxu0 0
    %676 = vmatpush1.bf16.msra.mxu0 0
    %677 = vmatprep.subr.bf16.mxu0 0
    %678 = vmatpush1.bf16.msra.mxu0 0
    %679 = vmatprep.subr.bf16.mxu0 0
    %680 = vmatpush1.bf16.msra.mxu0 0
    %681 = vmatprep.subr.bf16.mxu0 0
    %682 = vmatpush1.bf16.msra.mxu0 0
    %683 = vmatprep.mubr.bf16.mxu0 0
    %684 = vmatmul.mubr.bf16.gmra.mrb[0].mxu0 %v499
    %v685 = vpop.f32.mrb[0].mxu0
    %v686 = vadd.f32 %v637, %v685
    %v687 = vpop.f32.mrb[0].mxu0
    %v688 = vpop.f32.mrb[0].mxu0
    %v689 = vadd.f32 %v640, %v688
    %v690 = vpop.f32.mrb[0].mxu0
    %691 = vmatprep.mubr.bf16.mxu0 0
    %692 = vmatmul.mubr.bf16.gmra.mrb[0].mxu0 %v502
    %v693 = vpop.f32.mrb[0].mxu0
    %v694 = vadd.f32 %v645, %v693
    %v695 = vpop.f32.mrb[0].mxu0
    %v696 = vpop.f32.mrb[0].mxu0
    %v697 = vadd.f32 %v648, %v696
    %v698 = vpop.f32.mrb[0].mxu0
    %699 = vdwg.mxu0
    %v700 = vmax.f32 %v686, 0.0
    %v701 = vmax.f32 %v689, 0.0
    %v702 = vmax.f32 %v694, 0.0
    %v703 = vmax.f32 %v697, 0.0
    %v704 = vpack.c.bf16 %v701, %v700
    %v705 = vpack.c.bf16 %v703, %v702
    %v706 = vld [vmem:[%s3] sm:$0xf]
    %v707 = vld [vmem:[%s3 + $0x4] sm:$0xf]
    %v708 = vld [vmem:[%s3 + $0x8] sm:$0xf]
    %v709 = vld [vmem:[%s3 + $0xc] sm:$0xf]
    %v710 = vld [vmem:[%s3 + $0x10] sm:$0xf]
    %v711 = vld [vmem:[%s3 + $0x14] sm:$0xf]
    %v712 = vld [vmem:[%s3 + $0x18] sm:$0xf]
    %v713 = vld [vmem:[%s3 + $0x1c] sm:$0xf]
    %v714 = vld [vmem:[%s3 + $0x20] sm:$0xf]
    %v715 = vld [vmem:[%s3 + $0x24] sm:$0xf]
    %v716 = vld [vmem:[%s3 + $0x28] sm:$0xf]
    %v717 = vld [vmem:[%s3 + $0x2c] sm:$0xf]
    %v718 = vld [vmem:[%s3 + $0x30] sm:$0xf]
    %v719 = vld [vmem:[%s3 + $0x34] sm:$0xf]
    %v720 = vld [vmem:[%s3 + $0x38] sm:$0xf]
    %v721 = vld [vmem:[%s3 + $0x3c] sm:$0xf]
    %v722 = vld [vmem:[%s4] sm:$0x1]
    %v724 = vlaneseq
    %v725 = vshrl.u32 %v724, 7
    %v726 = vsub.s32 0, %v725
    %v727 = vrot.slane %v722, %v726
    %v745 = vunpack.c.l.b16 %v706
    %v746 = vunpack.c.l.b16 %v707
    %v747 = vunpack.c.l.b16 %v708
    %v748 = vunpack.c.l.b16 %v709
    %v749 = vunpack.c.l.b16 %v710
    %v750 = vunpack.c.l.b16 %v711
    %v751 = vunpack.c.l.b16 %v712
    %v752 = vunpack.c.l.b16 %v713
    %v753 = vunpack.c.l.b16 %v714
    %v754 = vunpack.c.l.b16 %v715
    %v755 = vunpack.c.l.b16 %v716
    %v756 = vunpack.c.l.b16 %v717
    %v757 = vunpack.c.l.b16 %v718
    %v758 = vunpack.c.l.b16 %v719
    %v759 = vunpack.c.l.b16 %v720
    %v760 = vunpack.c.l.b16 %v721
    %v761 = vpack.c.b16 %v746, %v745
    %v762 = vpack.c.b16 %v748, %v747
    %v763 = vpack.c.b16 %v750, %v749
    %v764 = vpack.c.b16 %v752, %v751
    %v765 = vpack.c.b16 %v754, %v753
    %v766 = vpack.c.b16 %v756, %v755
    %v767 = vpack.c.b16 %v758, %v757
    %v768 = vpack.c.b16 %v760, %v759
    %777 = vmatprep.subr.bf16.mxu0 0
    %778 = vmatpush1.bf16.msra.mxu0 %v761
    %779 = vmatprep.subr.bf16.mxu0 0
    %780 = vmatpush1.bf16.msra.mxu0 %v762
    %781 = vmatprep.subr.bf16.mxu0 0
    %782 = vmatpush1.bf16.msra.mxu0 %v763
    %783 = vmatprep.subr.bf16.mxu0 0
    %784 = vmatpush1.bf16.msra.mxu0 %v764
    %785 = vmatprep.subr.bf16.mxu0 0
    %786 = vmatpush1.bf16.msra.mxu0 %v765
    %787 = vmatprep.subr.bf16.mxu0 0
    %788 = vmatpush1.bf16.msra.mxu0 %v766
    %789 = vmatprep.subr.bf16.mxu0 0
    %790 = vmatpush1.bf16.msra.mxu0 %v767
    %791 = vmatprep.subr.bf16.mxu0 0
    %792 = vmatpush1.bf16.msra.mxu0 %v768
    %793 = vmatprep.subr.bf16.mxu0 0
    %794 = vmatpush1.bf16.msra.mxu0 0
    %795 = vmatprep.subr.bf16.mxu0 0
    %796 = vmatpush1.bf16.msra.mxu0 0
    %797 = vmatprep.subr.bf16.mxu0 0
    %798 = vmatpush1.bf16.msra.mxu0 0
    %799 = vmatprep.subr.bf16.mxu0 0
    %800 = vmatpush1.bf16.msra.mxu0 0
    %801 = vmatprep.subr.bf16.mxu0 0
    %802 = vmatpush1.bf16.msra.mxu0 0
    %803 = vmatprep.subr.bf16.mxu0 0
    %804 = vmatpush1.bf16.msra.mxu0 0
    %805 = vmatprep.subr.bf16.mxu0 0
    %806 = vmatpush1.bf16.msra.mxu0 0
    %807 = vmatprep.subr.bf16.mxu0 0
    %808 = vmatpush1.bf16.msra.mxu0 0
    %809 = vmatprep.mubr.bf16.mxu0 0
    %810 = vmatmul.mubr.bf16.gmra.mrb[0].mxu0 %v704
    %v811 = vpop.f32.mrb[0].mxu0
    %v812 = vadd.f32 %v727, %v811
    %v813 = vpop.f32.mrb[0].mxu0
    %v814 = vpop.f32.mrb[0].mxu0
    %v815 = vadd.f32 %v727, %v814
    %v816 = vpop.f32.mrb[0].mxu0
    %817 = vmatprep.mubr.bf16.mxu0 0
    %818 = vmatmul.mubr.bf16.gmra.mrb[0].mxu0 %v705
    %v819 = vpop.f32.mrb[0].mxu0
    %v820 = vadd.f32 %v727, %v819
    %v821 = vpop.f32.mrb[0].mxu0
    %v822 = vpop.f32.mrb[0].mxu0
    %v823 = vadd.f32 %v727, %v822
    %v824 = vpop.f32.mrb[0].mxu0
    %825 = vdwg.mxu0
    %v826 = vmax.f32 %v812, 0.0
    %v827 = vmax.f32 %v815, 0.0
    %v828 = vmax.f32 %v820, 0.0
    %v829 = vmax.f32 %v823, 0.0
    %v830 = vpack.c.bf16 %v827, %v826
    %v831 = vpack.c.bf16 %v829, %v828
    %v832 = vld [vmem:[%s5] sm:$0xf]
    %v833 = vld [vmem:[%s5 + $0x4] sm:$0xf]
    %v834 = vld [vmem:[%s5 + $0x8] sm:$0xf]
    %v835 = vld [vmem:[%s5 + $0xc] sm:$0xf]
    %v836 = vld [vmem:[%s5 + $0x10] sm:$0xf]
    %v837 = vld [vmem:[%s5 + $0x14] sm:$0xf]
    %v838 = vld [vmem:[%s5 + $0x18] sm:$0xf]
    %v839 = vld [vmem:[%s5 + $0x1c] sm:$0xf]
    %v840 = vld [vmem:[%s6] sm:$0x1]
    %v842 = vlaneseq
    %v843 = vshrl.u32 %v842, 7
    %v844 = vsub.s32 0, %v843
    %v845 = vrot.slane %v840, %v844
    %v855 = vunpack.c.l.b16 %v832
    %v856 = vunpack.c.l.b16 %v833
    %v857 = vunpack.c.l.b16 %v834
    %v858 = vunpack.c.l.b16 %v835
    %v859 = vunpack.c.l.b16 %v836
    %v860 = vunpack.c.l.b16 %v837
    %v861 = vunpack.c.l.b16 %v838
    %v862 = vunpack.c.l.b16 %v839
    %v863 = vpack.c.b16 %v856, %v855
    %v864 = vpack.c.b16 %v858, %v857
    %v865 = vpack.c.b16 %v860, %v859
    %v866 = vpack.c.b16 %v862, %v861
    %vm871 = vcmask 523264
    %v873 = vsel %vm871, %v830, 0
    %v876 = vsel %vm871, %v831, 0
    %878 = vmatprep.subr.bf16.mxu0 0
    %879 = vmatpush1.bf16.msra.mxu0 %v863
    %880 = vmatprep.subr.bf16.mxu0 0
    %881 = vmatpush1.bf16.msra.mxu0 %v864
    %882 = vmatprep.subr.bf16.mxu0 0
    %883 = vmatpush1.bf16.msra.mxu0 %v865
    %884 = vmatprep.subr.bf16.mxu0 0
    %885 = vmatpush1.bf16.msra.mxu0 %v866
    %886 = vmatprep.subr.bf16.mxu0 0
    %887 = vmatpush1.bf16.msra.mxu0 0
    %888 = vmatprep.subr.bf16.mxu0 0
    %889 = vmatpush1.bf16.msra.mxu0 0
    %890 = vmatprep.subr.bf16.mxu0 0
    %891 = vmatpush1.bf16.msra.mxu0 0
    %892 = vmatprep.subr.bf16.mxu0 0
    %893 = vmatpush1.bf16.msra.mxu0 0
    %894 = vmatprep.subr.bf16.mxu0 0
    %895 = vmatpush1.bf16.msra.mxu0 0
    %896 = vmatprep.subr.bf16.mxu0 0
    %897 = vmatpush1.bf16.msra.mxu0 0
    %898 = vmatprep.subr.bf16.mxu0 0
    %899 = vmatpush1.bf16.msra.mxu0 0
    %900 = vmatprep.subr.bf16.mxu0 0
    %901 = vmatpush1.bf16.msra.mxu0 0
    %902 = vmatprep.subr.bf16.mxu0 0
    %903 = vmatpush1.bf16.msra.mxu0 0
    %904 = vmatprep.subr.bf16.mxu0 0
    %905 = vmatpush1.bf16.msra.mxu0 0
    %906 = vmatprep.subr.bf16.mxu0 0
    %907 = vmatpush1.bf16.msra.mxu0 0
    %908 = vmatprep.subr.bf16.mxu0 0
    %909 = vmatpush1.bf16.msra.mxu0 0
    %910 = vmatprep.mubr.bf16.mxu0 0
    %911 = vmatmul.mubr.bf16.gmra.mrb[0].mxu0 %v873
    %v912 = vpop.f32.mrb[0].mxu0
    %v913 = vadd.f32 %v845, %v912
    %v914 = vpop.f32.mrb[0].mxu0
    %v915 = vpop.f32.mrb[0].mxu0
    %v916 = vadd.f32 %v845, %v915
    %v917 = vpop.f32.mrb[0].mxu0
    %918 = vmatprep.mubr.bf16.mxu0 0
    %919 = vmatmul.mubr.bf16.gmra.mrb[0].mxu0 %v876
    %v920 = vpop.f32.mrb[0].mxu0
    %v921 = vadd.f32 %v845, %v920
    %v922 = vpop.f32.mrb[0].mxu0
    %v923 = vpop.f32.mrb[0].mxu0
    %v924 = vadd.f32 %v845, %v923
    %v925 = vpop.f32.mrb[0].mxu0
    %926 = vdwg.mxu0
    %v927 = vpack.c.bf16 %v916, %v913
    %v928 = vpack.c.bf16 %v924, %v921
    %v931 = vunpack.c.l.b16 %v927
    %v932 = vunpack.c.h.b16 %v927
    %v933 = vunpack.c.l.b16 %v928
    %v934 = vunpack.c.h.b16 %v928
    %v935 = vpack.c.b16 %v931, %v931
    %v936 = vpack.c.b16 %v932, %v932
    %v937 = vpack.c.b16 %v933, %v933
    %v938 = vpack.c.b16 %v934, %v934
    %943 = vst [vmem:[#allocation7] sm:$0xf] %v935
    %944 = vst [vmem:[#allocation7 + $0x4] sm:$0xf] %v936
    %945 = vst [vmem:[#allocation7 + $0x8] sm:$0xf] %v937
    %946 = vst [vmem:[#allocation7 + $0xc] sm:$0xf] %v938
    // Predicated region
    $region38: #{tpu_custom_call.1} parent=1 // pred_check
      _
    $region39: #{tpu_custom_call.1} parent=1 // pred_check_branch
      %948 = sbr.rel (0) target = $region41
    $region40: #{tpu_custom_call.1} parent=1 // pred_region
      %s950 = ssub.s32 256, 256
      %951 = vsyncadd [#allocation4], %s950
      %s952 = sshll.u32 [#allocation7], 4
      %s953 = int_to_ptr.vmem [resolvable:$true] %s952
      %958 = dma.vmem_to_hbm [thread:$0]  %s953, 256, %s7, [#allocation4], 64, 64, 4
    $region41: #{tpu_custom_call.1} parent=1 // pred_fallthru
      _
    // Predicated region
    $region42: #{tpu_custom_call.1} parent=1 // pred_check
      _
    $region43: #{tpu_custom_call.1} parent=1 // pred_check_branch
      %960 = sbr.rel (0) target = $region45
    $region44: #{tpu_custom_call.1} parent=1 // pred_region
      %961 = dma.done [#allocation4], 256
    $region45: #{tpu_custom_call.1} parent=1 // pred_fallthru
      _
    %962 = vsyncpa [#allocation3], 1
    %963 = vsyncpa [#allocation6], 1
    %964 = vsyncpa [#allocation4], 1

</llo_original>
